<compile_context>
chip_gen: v6e
topology: v6e:2x2x1
jax: 0.10.0
libtpu: 0.0.40
codegen_flags: <defaults>
</compile_context>

<pallas_src>
import jax
import jax.numpy as jnp
from jax import lax
from jax.experimental import pallas as pl
from jax.experimental.pallas import tpu as pltpu

HID = 100          # hidden width of both encoder Linears
LANE = 128         # TPU lane width
PRED_LANE = HID    # padded (always-zero) feat lane where pred is packed


def _round_up(n, m):
    return ((n + m - 1) // m) * m


def mlp_kernel(x_ref, w1_ref, b1_ref, w2_ref, b2_ref, w3_ref, b3_ref, out_ref):
    # encoder: Linear(101,100) -> ReLU -> Linear(100,100) -> ReLU.
    # Weights are zero-padded to 128 output lanes (padded cols/rows and biases
    # are zero), so padded hidden lanes are exactly 0 through ReLU and dot.
    x = x_ref[...]                                                   # (TM, 101)
    h1 = jnp.dot(x, w1_ref[...], preferred_element_type=jnp.float32) + b1_ref[...]
    h1 = jnp.maximum(h1, 0.0)                                        # (TM, 128)
    h2 = jnp.dot(h1, w2_ref[...], preferred_element_type=jnp.float32) + b2_ref[...]
    h2 = jnp.maximum(h2, 0.0)                                        # (TM, 128)
    # regression_layer Linear(100,1): VPU multiply + row reduce (N=1 MXU matmul
    # would be wasteful; kernel is HBM-bound anyway). b3 is an SMEM scalar.
    pred = jnp.sum(h2 * w3_ref[...], axis=-1, keepdims=True) + b3_ref[0]
    # Pack pred into feat's padded lane PRED_LANE -> one lane-dense output
    # stream (unmasked vst), no separate (TM,1) output buffer/DMA.
    lane = lax.broadcasted_iota(jnp.int32, h2.shape, dimension=1)
    out_ref[...] = h2 + jnp.where(lane == PRED_LANE, pred, 0.0)


def prepare_params(params):
    """Pad weights to 128 lanes ONCE (hoisted out of the per-call hot path)."""
    w1, b1, w2, b2, w3, b3 = params
    f32 = jnp.float32
    hid = w1.shape[1]
    hp = LANE - hid
    w1p = jnp.pad(w1.astype(f32), ((0, 0), (0, hp)))                 # (101, 128)
    b1p = jnp.pad(b1.astype(f32).reshape(1, -1), ((0, 0), (0, hp)))  # (1, 128)
    w2p = jnp.pad(w2.astype(f32), ((0, hp), (0, hp)))                # (128, 128)
    b2p = jnp.pad(b2.astype(f32).reshape(1, -1), ((0, 0), (0, hp)))  # (1, 128)
    w3p = jnp.pad(w3.astype(f32).reshape(1, -1), ((0, 0), (0, hp)))  # (1, 128)
    b3p = b3.astype(f32).reshape((1,))                               # SMEM scalar
    return (w1p, b1p, w2p, b2p, w3p, b3p)


def _tile_rows(batch, tm):
    # Cap the tile so large batches get a >=2-step grid (v7x megacore shards
    # the "parallel" axis across its 2 TensorCores); keep sublane multiple of 8.
    cap = max(8, _round_up(pl.cdiv(batch, 2), 256))
    t = min(tm, cap, _round_up(batch, 8))
    t = max(8, (t // 8) * 8)
    if t > batch:
        t = batch          # block == full batch dim is legal for any size
    return t


def mlp_forward_packed(x, padded_params, *, tm=2048):
    """Packed output (batch, 128) f32: lanes [:100] = features, lane 100 = pred."""
    w1p, b1p, w2p, b2p, w3p, b3p = padded_params
    batch, in_dim = x.shape
    tm_eff = _tile_rows(batch, tm)
    grid = (pl.cdiv(batch, tm_eff),)   # edge block (if any) masked by Pallas

    return pl.pallas_call(
        mlp_kernel,
        grid=grid,
        out_shape=jax.ShapeDtypeStruct((batch, LANE), jnp.float32),
        in_specs=[
            # x: last dim == full array dim (101) -> no wrapper pad needed,
            # Mosaic pads the K dim internally.
            pl.BlockSpec((tm_eff, in_dim), lambda i: (i, 0)),
            pl.BlockSpec(w1p.shape, lambda i: (0, 0)),           # resident
            pl.BlockSpec(b1p.shape, lambda i: (0, 0)),
            pl.BlockSpec(w2p.shape, lambda i: (0, 0)),           # resident
            pl.BlockSpec(b2p.shape, lambda i: (0, 0)),
            pl.BlockSpec(w3p.shape, lambda i: (0, 0)),
            pl.BlockSpec(memory_space=pltpu.MemorySpace.SMEM),   # b3 scalar
        ],
        out_specs=pl.BlockSpec((tm_eff, LANE), lambda i: (i, 0)),
        compiler_params=pltpu.CompilerParams(
            dimension_semantics=("parallel",),
            vmem_limit_bytes=32 * 1024 * 1024,   # big tiles compile on v5e too
        ),
    )(x.astype(jnp.float32), w1p, b1p, w2p, b2p, w3p, b3p)


def mlp_forward(x, padded_params, *, tm=2048):
    """Returns (pred (batch,1), features (batch,100)) like the PyTorch module."""
    out = mlp_forward_packed(x, padded_params, tm=tm)
    # TODO(synk): consumers that tolerate the packed 128-lane layout should call
    # mlp_forward_packed directly and skip these unpack slices (extra HBM pass).
    return out[:, PRED_LANE:PRED_LANE + 1], out[:, :HID]


def init_params(key, m=100, dim_x=1, hidden=100, out_dim=1):
    # Matches MLP.init_weights: Linear weights ~ N(0, 0.001^2), biases = 0.
    # Stored transposed vs PyTorch: (in_features, out_features).
    k1, k2, k3 = jax.random.split(key, 3)
    in_dim = m + dim_x
    w1 = 0.001 * jax.random.normal(k1, (in_dim, hidden), dtype=jnp.float32)
    b1 = jnp.zeros((hidden,), dtype=jnp.float32)
    w2 = 0.001 * jax.random.normal(k2, (hidden, hidden), dtype=jnp.float32)
    b2 = jnp.zeros((hidden,), dtype=jnp.float32)
    w3 = 0.001 * jax.random.normal(k3, (hidden, out_dim), dtype=jnp.float32)
    b3 = jnp.zeros((out_dim,), dtype=jnp.float32)
    return (w1, b1, w2, b2, w3, b3)


def mlp_reference(x, params):
    w1, b1, w2, b2, w3, b3 = params
    h1 = jnp.maximum(x @ w1 + b1[None, :], 0.0)
    h2 = jnp.maximum(h1 @ w2 + b2[None, :], 0.0)
    return h2 @ w3 + b3[None, :], h2


if __name__ == "__main__":
    m, dim_x = 100, 1
    key = jax.random.PRNGKey(0)
    kp, kx1, kx2, ks = jax.random.split(key, 4)
    params = init_params(kp, m=m, dim_x=dim_x)
    padded = prepare_params(params)          # hoisted weight padding (once)

    fwd = jax.jit(mlp_forward)

    # Small, single-tile case.
    batch = 8
    x = jax.random.normal(kx1, (batch, m + dim_x), dtype=jnp.float32)
    pred, feat = fwd(x, padded)
    jax.block_until_ready((pred, feat))
    pred_ref, feat_ref = mlp_reference(x, params)
    assert pred.shape == (batch, 1) and feat.shape == (batch, 100)
    assert jnp.allclose(pred, pred_ref, atol=1e-5, rtol=1e-4)
    assert jnp.allclose(feat, feat_ref, atol=1e-5, rtol=1e-4)

    # Multi-tile parallel grid with a masked edge block (300 % 256 != 0).
    batch2 = 300
    x2 = jax.random.normal(kx2, (batch2, m + dim_x), dtype=jnp.float32)
    pred2, feat2 = fwd(x2, padded)
    jax.block_until_ready((pred2, feat2))
    pred2_ref, feat2_ref = mlp_reference(x2, params)
    assert pred2.shape == (batch2, 1) and feat2.shape == (batch2, 100)
    assert jnp.allclose(pred2, pred2_ref, atol=1e-5, rtol=1e-4)
    assert jnp.allclose(feat2, feat2_ref, atol=1e-5, rtol=1e-4)

    # Stress numerics with larger-magnitude weights (same kernel, non-trivial
    # values) so the correctness check is not dominated by the tiny 1e-3 init.
    big_params = tuple(p * 500.0 if p.ndim == 2 else p for p in params)
    big_padded = prepare_params(big_params)
    pred3, feat3 = fwd(x2, big_padded)
    jax.block_until_ready((pred3, feat3))
    pred3_ref, feat3_ref = mlp_reference(x2, big_params)
    assert jnp.allclose(pred3, pred3_ref, atol=1e-4, rtol=1e-4)
    assert jnp.allclose(feat3, feat3_ref, atol=1e-4, rtol=1e-4)

    print("KERNEL_OK")
</pallas_src>

<mosaic_0001>
module attributes {stable_mosaic.version = 11 : i64} {
  func.func @mlp_kernel(%arg0: i32, %arg1: memref<8x101xf32, #tpu.memory_space<vmem>>, %arg2: memref<101x128xf32, #tpu.memory_space<vmem>>, %arg3: memref<1x128xf32, #tpu.memory_space<vmem>>, %arg4: memref<128x128xf32, #tpu.memory_space<vmem>>, %arg5: memref<1x128xf32, #tpu.memory_space<vmem>>, %arg6: memref<1x128xf32, #tpu.memory_space<vmem>>, %arg7: memref<1xf32, #tpu.memory_space<smem>>, %arg8: memref<8x128xf32, #tpu.memory_space<vmem>>) attributes {dimension_semantics = [#tpu.dimension_semantics<parallel>], iteration_bounds = array<i64: 1>, scalar_prefetch = 0 : i64, scratch_operands = 0 : i64, tpu.core_type = #tpu.core_type<tc>, window_params = [{transform_indices = @transform_0, window_bounds = array<i64: 8, 101>}, {pipeline_mode = #tpu.pipeline_mode<synchronous>, transform_indices = @transform_1, window_bounds = array<i64: 101, 128>}, {pipeline_mode = #tpu.pipeline_mode<synchronous>, transform_indices = @transform_2, window_bounds = array<i64: 1, 128>}, {pipeline_mode = #tpu.pipeline_mode<synchronous>, transform_indices = @transform_3, window_bounds = array<i64: 128, 128>}, {pipeline_mode = #tpu.pipeline_mode<synchronous>, transform_indices = @transform_4, window_bounds = array<i64: 1, 128>}, {pipeline_mode = #tpu.pipeline_mode<synchronous>, transform_indices = @transform_5, window_bounds = array<i64: 1, 128>}, {transform_indices = @transform_6, window_bounds = array<i64: 1>}, {transform_indices = @transform_7, window_bounds = array<i64: 8, 128>}]} {
    %c0 = arith.constant 0 : index
    %c0_0 = arith.constant 0 : index
    %0 = vector.load %arg1[%c0, %c0_0] : memref<8x101xf32, #tpu.memory_space<vmem>>, vector<8x101xf32>
    %c0_1 = arith.constant 0 : index
    %c0_2 = arith.constant 0 : index
    %1 = vector.load %arg2[%c0_1, %c0_2] : memref<101x128xf32, #tpu.memory_space<vmem>>, vector<101x128xf32>
    %cst = arith.constant dense<0.000000e+00> : vector<8x128xf32>
    %2 = tpu.matmul %0, %1, %cst {dimension_numbers = #tpu.dot_dimension_numbers<[1], [0], [0], [1], [0, 0, 1, 1], [], []>} : vector<8x101xf32>, vector<101x128xf32>, vector<8x128xf32> -> vector<8x128xf32>
    %c0_3 = arith.constant 0 : index
    %c0_4 = arith.constant 0 : index
    %3 = vector.load %arg3[%c0_3, %c0_4] : memref<1x128xf32, #tpu.memory_space<vmem>>, vector<1x128xf32>
    %4 = vector.broadcast %3 : vector<1x128xf32> to vector<8x128xf32>
    %5 = arith.addf %2, %4 : vector<8x128xf32>
    %cst_5 = arith.constant 0.000000e+00 : f32
    %6 = vector.broadcast %cst_5 : f32 to vector<8x128xf32>
    %7 = arith.maximumf %5, %6 : vector<8x128xf32>
    %c0_6 = arith.constant 0 : index
    %c0_7 = arith.constant 0 : index
    %8 = vector.load %arg4[%c0_6, %c0_7] : memref<128x128xf32, #tpu.memory_space<vmem>>, vector<128x128xf32>
    %cst_8 = arith.constant dense<0.000000e+00> : vector<8x128xf32>
    %9 = tpu.matmul %7, %8, %cst_8 {dimension_numbers = #tpu.dot_dimension_numbers<[1], [0], [0], [1], [0, 0, 1, 1], [], []>} : vector<8x128xf32>, vector<128x128xf32>, vector<8x128xf32> -> vector<8x128xf32>
    %c0_9 = arith.constant 0 : index
    %c0_10 = arith.constant 0 : index
    %10 = vector.load %arg5[%c0_9, %c0_10] : memref<1x128xf32, #tpu.memory_space<vmem>>, vector<1x128xf32>
    %11 = vector.broadcast %10 : vector<1x128xf32> to vector<8x128xf32>
    %12 = arith.addf %9, %11 : vector<8x128xf32>
    %cst_11 = arith.constant 0.000000e+00 : f32
    %13 = vector.broadcast %cst_11 : f32 to vector<8x128xf32>
    %14 = arith.maximumf %12, %13 : vector<8x128xf32>
    %c0_12 = arith.constant 0 : index
    %c0_13 = arith.constant 0 : index
    %15 = vector.load %arg6[%c0_12, %c0_13] : memref<1x128xf32, #tpu.memory_space<vmem>>, vector<1x128xf32>
    %16 = vector.broadcast %15 : vector<1x128xf32> to vector<8x128xf32>
    %17 = arith.mulf %14, %16 : vector<8x128xf32>
    %cst_14 = arith.constant dense<0.000000e+00> : vector<8xf32>
    %18 = vector.multi_reduction <add>, %17, %cst_14 [1] : vector<8x128xf32> to vector<8xf32>
    %19 = vector.shape_cast %18 : vector<8xf32> to vector<8x1xf32>
    %c0_15 = arith.constant 0 : index
    %20 = memref.load %arg7[%c0_15] : memref<1xf32, #tpu.memory_space<smem>>
    %21 = vector.broadcast %20 : f32 to vector<8x1xf32>
    %22 = arith.addf %19, %21 : vector<8x1xf32>
    %23 = tpu.iota {dimensions = array<i32: 1>} : vector<8x128xi32>
    %c100_i32 = arith.constant 100 : i32
    %24 = vector.broadcast %c100_i32 : i32 to vector<8x128xi32>
    %25 = arith.cmpi eq, %23, %24 : vector<8x128xi32>
    %cst_16 = arith.constant 0.000000e+00 : f32
    %26 = vector.shape_cast %22 : vector<8x1xf32> to vector<8x1xf32>
    %27 = vector.broadcast %26 : vector<8x1xf32> to vector<8x128xf32>
    %28 = vector.broadcast %cst_16 : f32 to vector<8x128xf32>
    %29 = arith.select %25, %27, %28 : vector<8x128xi1>, vector<8x128xf32>
    %30 = arith.addf %14, %29 : vector<8x128xf32>
    %c0_17 = arith.constant 0 : index
    %c0_18 = arith.constant 0 : index
    %31 = vector.load %arg8[%c0_17, %c0_18] : memref<8x128xf32, #tpu.memory_space<vmem>>, vector<8x128xf32>
    tpu.vector_store %arg8[%c0_17, %c0_18], %30 {strides = array<i32>} : memref<8x128xf32, #tpu.memory_space<vmem>>, vector<8x128xf32>,
    return
  }
  func.func @transform_0(%arg0: i32) -> (i32, i32) {
    %c0_i32 = arith.constant 0 : i32
    %c0_i32_0 = arith.constant 0 : i32
    return %arg0, %c0_i32 : i32, i32
  }
  func.func @transform_1(%arg0: i32) -> (i32, i32) {
    %c0_i32 = arith.constant 0 : i32
    %c0_i32_0 = arith.constant 0 : i32
    %c0_i32_1 = arith.constant 0 : i32
    return %c0_i32, %c0_i32_0 : i32, i32
  }
  func.func @transform_2(%arg0: i32) -> (i32, i32) {
    %c0_i32 = arith.constant 0 : i32
    %c0_i32_0 = arith.constant 0 : i32
    %c0_i32_1 = arith.constant 0 : i32
    return %c0_i32, %c0_i32_0 : i32, i32
  }
  func.func @transform_3(%arg0: i32) -> (i32, i32) {
    %c0_i32 = arith.constant 0 : i32
    %c0_i32_0 = arith.constant 0 : i32
    %c0_i32_1 = arith.constant 0 : i32
    return %c0_i32, %c0_i32_0 : i32, i32
  }
  func.func @transform_4(%arg0: i32) -> (i32, i32) {
    %c0_i32 = arith.constant 0 : i32
    %c0_i32_0 = arith.constant 0 : i32
    %c0_i32_1 = arith.constant 0 : i32
    return %c0_i32, %c0_i32_0 : i32, i32
  }
  func.func @transform_5(%arg0: i32) -> (i32, i32) {
    %c0_i32 = arith.constant 0 : i32
    %c0_i32_0 = arith.constant 0 : i32
    %c0_i32_1 = arith.constant 0 : i32
    return %c0_i32, %c0_i32_0 : i32, i32
  }
  func.func @transform_6(%arg0: i32) -> i32 {
    %c0_i32 = arith.constant 0 : i32
    %c0_i32_0 = arith.constant 0 : i32
    return %c0_i32 : i32
  }
  func.func @transform_7(%arg0: i32) -> (i32, i32) {
    %c0_i32 = arith.constant 0 : i32
    %c0_i32_0 = arith.constant 0 : i32
    return %arg0, %c0_i32 : i32, i32
  }
}

</mosaic_0001>

<llo_original>
// kernel: mlp_forward.1
$region0: #{mlp_forward.1}
  #allocation0 [shape = 'u32[]', space=smem, size = 0x4, offset = 0x4, fixed_abs, tag = 'smem constant byte address 0x4 - core index']
  #allocation1 [shape = 'u32[144,128]{1,0:T(1,128)}', space=vmem, size = 0x12000, scoped, tag = 'internal scratch']
  #allocation2 [shape = 'f32[1]{0:T(128)S(6)}', space=smem, size = 0x200, scoped, tag = 'scoped memory for mlp_forward.1']
  %s0 = inlined_call_operand.hbm [shape: f32[8,101], index: 0, kind: input, shape index: {}]
  %s1 = inlined_call_operand.hbm [shape: f32[101,128], index: 1, kind: input, shape index: {}]
  %s2 = inlined_call_operand.vmem [shape: f32[1,128], index: 2, kind: input, shape index: {}]
  %s3 = inlined_call_operand.hbm [shape: f32[128,128], index: 3, kind: input, shape index: {}]
  %s4 = inlined_call_operand.vmem [shape: f32[1,128], index: 4, kind: input, shape index: {}]
  %s5 = inlined_call_operand.vmem [shape: f32[1,128], index: 5, kind: input, shape index: {}]
  %s6 = inlined_call_operand.<no memory space> [shape: f32[1], index: 6, kind: input, shape index: {}]
  %s7 = inlined_call_operand.vmem [shape: f32[8,128], index: 7, kind: output, shape index: {}]
  %s8 = sld [smem:[#allocation0]]
  $region50: #{mlp_forward.1} parent=0
    _
  %s10 = ssub.s32 1, %s8
  %s11 = scalar_select 0, %s10, %s8
  %12 = sst [smem:[#allocation2]] %s6
  $region1: #{mlp_forward.1} parent=0
    #allocation3 [shape = 'u8[4096]{0}', space=vmem, size = 0x1000, scoped, tag = 'input window, operand 0, single buffered']
    #allocation4 [shape = 's32[1]{0}', space=sflag, size = 0x4, scoped, tag = 'scoped memory for mlp_forward.1']
    #allocation5 [shape = 'u8[53248]{0}', space=vmem, size = 0xd000, scoped, tag = 'input window, operand 1, single buffered']
    #allocation6 [shape = 's32[1]{0}', space=sflag, size = 0x4, scoped, tag = 'scoped memory for mlp_forward.1']
    #allocation7 [shape = 'u8[65536]{0}', space=vmem, size = 0x10000, scoped, tag = 'input window, operand 3, single buffered']
    %13 = vsyncpa [#allocation4], 0
    %14 = vsyncpa [#allocation6], 0
    // Predicated region
    $region2: #{mlp_forward.1} parent=1 // pred_check
      _
    $region3: #{mlp_forward.1} parent=1 // pred_check_branch
      %16 = sbr.rel (0) target = $region5
    $region4: #{mlp_forward.1} parent=1 // pred_region
      %s18 = ssub.s32 128, 128
      %19 = vsyncadd [#allocation4], %s18
      %s21 = sshll.u32 [#allocation3], 4
      %s22 = int_to_ptr.vmem [resolvable:$true] %s21
      %24 = dma.hbm_to_vmem [thread:$0]  %s0, 128, %s22, [#allocation4]
    $region5: #{mlp_forward.1} parent=1 // pred_fallthru
      _
    // Predicated region
    $region6: #{mlp_forward.1} parent=1 // pred_check
      _
    $region7: #{mlp_forward.1} parent=1 // pred_check_branch
      %26 = sbr.rel (0) target = $region9
    $region8: #{mlp_forward.1} parent=1 // pred_region
      %s28 = ssub.s32 1664, 1664
      %29 = vsyncadd [#allocation6], %s28
      %s30 = sshll.u32 [#allocation5], 4
      %s31 = int_to_ptr.vmem [resolvable:$true] %s30
      %36 = dma.hbm_to_vmem [thread:$0]  %s1, 1664, %s31, [#allocation6], 128, 128, 8
    $region9: #{mlp_forward.1} parent=1 // pred_fallthru
      _
    // Predicated region
    $region10: #{mlp_forward.1} parent=1 // pred_check
      _
    $region11: #{mlp_forward.1} parent=1 // pred_check_branch
      %38 = sbr.rel (0) target = $region13
    $region12: #{mlp_forward.1} parent=1 // pred_region
      _
    $region13: #{mlp_forward.1} parent=1 // pred_fallthru
      _
    // Predicated region
    $region14: #{mlp_forward.1} parent=1 // pred_check
      _
    $region15: #{mlp_forward.1} parent=1 // pred_check_branch
      %40 = sbr.rel (0) target = $region17
    $region16: #{mlp_forward.1} parent=1 // pred_region
      %s42 = ssub.s32 2048, 2048
      %43 = vsyncadd [#allocation6], %s42
      %s44 = sshll.u32 [#allocation7], 4
      %s45 = int_to_ptr.vmem [resolvable:$true] %s44
      %50 = dma.hbm_to_vmem [thread:$0]  %s3, 2048, %s45, [#allocation6], 128, 128, 8
    $region17: #{mlp_forward.1} parent=1 // pred_fallthru
      _
    // Predicated region
    $region18: #{mlp_forward.1} parent=1 // pred_check
      _
    $region19: #{mlp_forward.1} parent=1 // pred_check_branch
      %52 = sbr.rel (0) target = $region21
    $region20: #{mlp_forward.1} parent=1 // pred_region
      _
    $region21: #{mlp_forward.1} parent=1 // pred_fallthru
      _
    // Predicated region
    $region22: #{mlp_forward.1} parent=1 // pred_check
      _
    $region23: #{mlp_forward.1} parent=1 // pred_check_branch
      %54 = sbr.rel (0) target = $region25
    $region24: #{mlp_forward.1} parent=1 // pred_region
      _
    $region25: #{mlp_forward.1} parent=1 // pred_fallthru
      _
    // Predicated region
    $region26: #{mlp_forward.1} parent=1 // pred_check
      _
    $region27: #{mlp_forward.1} parent=1 // pred_check_branch
      %56 = sbr.rel (0) target = $region29
    $region28: #{mlp_forward.1} parent=1 // pred_region
      _
    $region29: #{mlp_forward.1} parent=1 // pred_fallthru
      _
    // Predicated region
    $region30: #{mlp_forward.1} parent=1 // pred_check
      _
    $region31: #{mlp_forward.1} parent=1 // pred_check_branch
      %58 = sbr.rel (0) target = $region33
    $region32: #{mlp_forward.1} parent=1 // pred_region
      %59 = dma.done [#allocation4], 128
    $region33: #{mlp_forward.1} parent=1 // pred_fallthru
      _
    // Predicated region
    $region34: #{mlp_forward.1} parent=1 // pred_check
      _
    $region35: #{mlp_forward.1} parent=1 // pred_check_branch
      %61 = sbr.rel (0) target = $region37
    $region36: #{mlp_forward.1} parent=1 // pred_region
      %62 = dma.done [#allocation6], 1664
    $region37: #{mlp_forward.1} parent=1 // pred_fallthru
      _
    // Predicated region
    $region38: #{mlp_forward.1} parent=1 // pred_check
      _
    $region39: #{mlp_forward.1} parent=1 // pred_check_branch
      %64 = sbr.rel (0) target = $region41
    $region40: #{mlp_forward.1} parent=1 // pred_region
      %65 = dma.done [#allocation6], 2048
    $region41: #{mlp_forward.1} parent=1 // pred_fallthru
      _
    %v66 = vld [vmem:[#allocation3] sm:$0xff]
    %v67 = vld [vmem:[#allocation5] sm:$0xff]
    %v68 = vld [vmem:[#allocation5 + $0x8] sm:$0xff]
    %v69 = vld [vmem:[#allocation5 + $0x10] sm:$0xff]
    %v70 = vld [vmem:[#allocation5 + $0x18] sm:$0xff]
    %v71 = vld [vmem:[#allocation5 + $0x20] sm:$0xff]
    %v72 = vld [vmem:[#allocation5 + $0x28] sm:$0xff]
    %v73 = vld [vmem:[#allocation5 + $0x30] sm:$0xff]
    %v74 = vld [vmem:[#allocation5 + $0x38] sm:$0xff]
    %v75 = vld [vmem:[#allocation5 + $0x40] sm:$0xff]
    %v76 = vld [vmem:[#allocation5 + $0x48] sm:$0xff]
    %v77 = vld [vmem:[#allocation5 + $0x50] sm:$0xff]
    %v78 = vld [vmem:[#allocation5 + $0x58] sm:$0xff]
    %v79 = vld [vmem:[#allocation5 + $0x60] sm:$0x1f]
    %v80 = vld [vmem:[%s2] sm:$0x1]
    %v82 = vlaneseq
    %v83 = vshrl.u32 %v82, 7
    %v84 = vsub.s32 0, %v83
    %v85 = vrot.slane %v80, %v84
    %vm87 = vcmask 826368
    %v89 = vsel %vm87, %v66, 0
    %vm91 = vcmask 1044480
    %v93 = vsel %vm91, %v79, 0
    %95 = vmatprep.subr.mxu0 0.0
    %96 = vmatpush1.msra.mxu0 0.0
    %97 = vmatprep.subr.mxu0 0.0
    %98 = vmatpush1.msra.mxu0 0.0
    %99 = vmatprep.subr.mxu0 0.0
    %100 = vmatpush1.msra.mxu0 0.0
    %101 = vmatprep.subr.mxu0 0.0
    %102 = vmatpush1.msra.mxu0 %v93
    %103 = vmatprep.subr.mxu0 0.0
    %104 = vmatpush1.msra.mxu0 %v78
    %105 = vmatprep.subr.mxu0 0.0
    %106 = vmatpush1.msra.mxu0 %v77
    %107 = vmatprep.subr.mxu0 0.0
    %108 = vmatpush1.msra.mxu0 %v76
    %109 = vmatprep.subr.mxu0 0.0
    %110 = vmatpush1.msra.mxu0 %v75
    %111 = vmatprep.subr.mxu0 0.0
    %112 = vmatpush1.msra.mxu0 %v74
    %113 = vmatprep.subr.mxu0 0.0
    %114 = vmatpush1.msra.mxu0 %v73
    %115 = vmatprep.subr.mxu0 0.0
    %116 = vmatpush1.msra.mxu0 %v72
    %117 = vmatprep.subr.mxu0 0.0
    %118 = vmatpush1.msra.mxu0 %v71
    %119 = vmatprep.subr.mxu0 0.0
    %120 = vmatpush1.msra.mxu0 %v70
    %121 = vmatprep.subr.mxu0 0.0
    %122 = vmatpush1.msra.mxu0 %v69
    %123 = vmatprep.subr.mxu0 0.0
    %124 = vmatpush1.msra.mxu0 %v68
    %125 = vmatprep.subr.mxu0 0.0
    %126 = vmatpush1.msra.mxu0 %v67
    %127 = vmatprep.subr.mxu0 0.0
    %128 = vmatpush2.msra.mxu0 0.0
    %129 = vmatprep.subr.mxu0 0.0
    %130 = vmatpush2.msra.mxu0 0.0
    %131 = vmatprep.subr.mxu0 0.0
    %132 = vmatpush2.msra.mxu0 0.0
    %133 = vmatprep.subr.mxu0 0.0
    %134 = vmatpush2.msra.mxu0 0.0
    %135 = vmatprep.subr.mxu0 0.0
    %136 = vmatpush2.msra.mxu0 0.0
    %137 = vmatprep.subr.mxu0 0.0
    %138 = vmatpush2.msra.mxu0 0.0
    %139 = vmatprep.subr.mxu0 0.0
    %140 = vmatpush2.msra.mxu0 0.0
    %141 = vmatprep.subr.mxu0 0.0
    %142 = vmatpush2.msra.mxu0 0.0
    %143 = vmatprep.subr.mxu0 0.0
    %144 = vmatpush2.msra.mxu0 0.0
    %145 = vmatprep.subr.mxu0 0.0
    %146 = vmatpush2.msra.mxu0 0.0
    %147 = vmatprep.subr.mxu0 0.0
    %148 = vmatpush2.msra.mxu0 0.0
    %149 = vmatprep.subr.mxu0 0.0
    %150 = vmatpush2.msra.mxu0 0.0
    %151 = vmatprep.subr.mxu0 0.0
    %152 = vmatpush2.msra.mxu0 0.0
    %153 = vmatprep.subr.mxu0 0.0
    %154 = vmatpush2.msra.mxu0 0.0
    %155 = vmatprep.subr.mxu0 0.0
    %156 = vmatpush2.msra.mxu0 0.0
    %157 = vmatprep.subr.mxu0 0.0
    %158 = vmatpush2.msra.mxu0 0.0
    %159 = vmatprep.mubr.f32.mxu0 0.0
    %160 = vmatmul.mubr.f32.gmra.mxu0 %v89
    %v161 = vpop.f32.mrf.mxu0
    %v162 = vadd.f32 %v85, %v161
    %v163 = vpop.f32.mrf.mxu0
    %164 = vdwg.mxu0
    %v165 = vmax.f32 %v162, 0.0
    %v166 = vld [vmem:[#allocation7] sm:$0xff]
    %v167 = vld [vmem:[#allocation7 + $0x8] sm:$0xff]
    %v168 = vld [vmem:[#allocation7 + $0x10] sm:$0xff]
    %v169 = vld [vmem:[#allocation7 + $0x18] sm:$0xff]
    %v170 = vld [vmem:[#allocation7 + $0x20] sm:$0xff]
    %v171 = vld [vmem:[#allocation7 + $0x28] sm:$0xff]
    %v172 = vld [vmem:[#allocation7 + $0x30] sm:$0xff]
    %v173 = vld [vmem:[#allocation7 + $0x38] sm:$0xff]
    %v174 = vld [vmem:[#allocation7 + $0x40] sm:$0xff]
    %v175 = vld [vmem:[#allocation7 + $0x48] sm:$0xff]
    %v176 = vld [vmem:[#allocation7 + $0x50] sm:$0xff]
    %v177 = vld [vmem:[#allocation7 + $0x58] sm:$0xff]
    %v178 = vld [vmem:[#allocation7 + $0x60] sm:$0xff]
    %v179 = vld [vmem:[#allocation7 + $0x68] sm:$0xff]
    %v180 = vld [vmem:[#allocation7 + $0x70] sm:$0xff]
    %v181 = vld [vmem:[#allocation7 + $0x78] sm:$0xff]
    %v182 = vld [vmem:[%s4] sm:$0x1]
    %v184 = vlaneseq
    %v185 = vshrl.u32 %v184, 7
    %v186 = vsub.s32 0, %v185
    %v187 = vrot.slane %v182, %v186
    %189 = vmatprep.subr.mxu0 0.0
    %190 = vmatpush1.msra.mxu0 %v181
    %191 = vmatprep.subr.mxu0 0.0
    %192 = vmatpush1.msra.mxu0 %v180
    %193 = vmatprep.subr.mxu0 0.0
    %194 = vmatpush1.msra.mxu0 %v179
    %195 = vmatprep.subr.mxu0 0.0
    %196 = vmatpush1.msra.mxu0 %v178
    %197 = vmatprep.subr.mxu0 0.0
    %198 = vmatpush1.msra.mxu0 %v177
    %199 = vmatprep.subr.mxu0 0.0
    %200 = vmatpush1.msra.mxu0 %v176
    %201 = vmatprep.subr.mxu0 0.0
    %202 = vmatpush1.msra.mxu0 %v175
    %203 = vmatprep.subr.mxu0 0.0
    %204 = vmatpush1.msra.mxu0 %v174
    %205 = vmatprep.subr.mxu0 0.0
    %206 = vmatpush1.msra.mxu0 %v173
    %207 = vmatprep.subr.mxu0 0.0
    %208 = vmatpush1.msra.mxu0 %v172
    %209 = vmatprep.subr.mxu0 0.0
    %210 = vmatpush1.msra.mxu0 %v171
    %211 = vmatprep.subr.mxu0 0.0
    %212 = vmatpush1.msra.mxu0 %v170
    %213 = vmatprep.subr.mxu0 0.0
    %214 = vmatpush1.msra.mxu0 %v169
    %215 = vmatprep.subr.mxu0 0.0
    %216 = vmatpush1.msra.mxu0 %v168
    %217 = vmatprep.subr.mxu0 0.0
    %218 = vmatpush1.msra.mxu0 %v167
    %219 = vmatprep.subr.mxu0 0.0
    %220 = vmatpush1.msra.mxu0 %v166
    %221 = vmatprep.subr.mxu0 0.0
    %222 = vmatpush2.msra.mxu0 0.0
    %223 = vmatprep.subr.mxu0 0.0
    %224 = vmatpush2.msra.mxu0 0.0
    %225 = vmatprep.subr.mxu0 0.0
    %226 = vmatpush2.msra.mxu0 0.0
    %227 = vmatprep.subr.mxu0 0.0
    %228 = vmatpush2.msra.mxu0 0.0
    %229 = vmatprep.subr.mxu0 0.0
    %230 = vmatpush2.msra.mxu0 0.0
    %231 = vmatprep.subr.mxu0 0.0
    %232 = vmatpush2.msra.mxu0 0.0
    %233 = vmatprep.subr.mxu0 0.0
    %234 = vmatpush2.msra.mxu0 0.0
    %235 = vmatprep.subr.mxu0 0.0
    %236 = vmatpush2.msra.mxu0 0.0
    %237 = vmatprep.subr.mxu0 0.0
    %238 = vmatpush2.msra.mxu0 0.0
    %239 = vmatprep.subr.mxu0 0.0
    %240 = vmatpush2.msra.mxu0 0.0
    %241 = vmatprep.subr.mxu0 0.0
    %242 = vmatpush2.msra.mxu0 0.0
    %243 = vmatprep.subr.mxu0 0.0
    %244 = vmatpush2.msra.mxu0 0.0
    %245 = vmatprep.subr.mxu0 0.0
    %246 = vmatpush2.msra.mxu0 0.0
    %247 = vmatprep.subr.mxu0 0.0
    %248 = vmatpush2.msra.mxu0 0.0
    %249 = vmatprep.subr.mxu0 0.0
    %250 = vmatpush2.msra.mxu0 0.0
    %251 = vmatprep.subr.mxu0 0.0
    %252 = vmatpush2.msra.mxu0 0.0
    %253 = vmatprep.mubr.f32.mxu0 0.0
    %254 = vmatmul.mubr.f32.gmra.mxu0 %v165
    %v255 = vpop.f32.mrf.mxu0
    %v256 = vadd.f32 %v187, %v255
    %v257 = vpop.f32.mrf.mxu0
    %258 = vdwg.mxu0
    %v259 = vmax.f32 %v256, 0.0
    %v260 = vld [vmem:[%s5] sm:$0x1]
    %v262 = vlaneseq
    %v263 = vshrl.u32 %v262, 7
    %v264 = vsub.s32 0, %v263
    %v265 = vrot.slane %v260, %v264
    %v267 = vmul.f32 %v259, %v265
    %268 = vadd.xlane.f32.xlu0 %v267
    %v269 = vpop.xlane.xlu0 %268
    %s270 = sld [smem:[#allocation2]]
    %v271 = vstv %s270
    %v272 = vadd.f32 %v269, %v271
    %v273 = vlaneseq
    %v274 = vand.u32 %v273, 127
    %vm275 = vcmp.eq.s32.totalorder %v274, 100
    %v276 = vsel %vm275, %v272, 0.0
    %v277 = vadd.f32 %v259, %v276
    %278 = vst [vmem:[%s7] sm:$0xff] %v277
    // Predicated region
    $region42: #{mlp_forward.1} parent=1 // pred_check
      _
    $region43: #{mlp_forward.1} parent=1 // pred_check_branch
      %280 = sbr.rel (0) target = $region45
    $region44: #{mlp_forward.1} parent=1 // pred_region
      _
    $region45: #{mlp_forward.1} parent=1 // pred_fallthru
      _
    // Predicated region
    $region46: #{mlp_forward.1} parent=1 // pred_check
      _
    $region47: #{mlp_forward.1} parent=1 // pred_check_branch
      %282 = sbr.rel (0) target = $region49
    $region48: #{mlp_forward.1} parent=1 // pred_region
      _
    $region49: #{mlp_forward.1} parent=1 // pred_fallthru
      _
    %283 = vsyncpa [#allocation4], 1
    %284 = vsyncpa [#allocation6], 1

</llo_original>
